<compile_context>
chip_gen: v5e
topology: v5e:2x2
jax: 0.10.0
libtpu: 0.0.40
codegen_flags: <defaults>
</compile_context>

<pallas_src>
import jax
import jax.numpy as jnp
from jax.experimental import pallas as pl
from jax.experimental.pallas import tpu as pltpu


def _tpu_defaults():
    """(tile_rows, vmem_cap_bytes) chosen from the local TPU generation."""
    tile_rows, vmem_cap = 8192, 64 * 1024 * 1024       # safe everywhere (v7x VMEM = 64 MiB)
    try:
        kind = jax.local_devices()[0].device_kind.lower()
    except Exception:
        return tile_rows, vmem_cap
    if ("v5" in kind) or ("v6" in kind):
        # 128 MiB VMEM chips: larger tiles amortize the ~0.35 us per-grid-step cost.
        tile_rows, vmem_cap = 16384, 100 * 1024 * 1024
    return tile_rows, vmem_cap


def iou_loss(inputs, targets, *, smooth=1.0, tile_rows=None):
    """inputs: logits (any float dtype), targets: same-numel mask/soft targets."""
    assert inputs.size == targets.size, "inputs and targets must have equal numel"
    LANE = 128
    T = int(inputs.size)

    default_rows, vmem_cap = _tpu_defaults()
    if tile_rows is None:
        tile_rows = default_rows

    x_flat = inputs.reshape(-1)
    y_flat = targets.reshape(-1)

    rows_data = -(-T // LANE)
    rows = max(rows_data, 8)              # at least one (8,128) vreg worth of rows
    pad = rows * LANE - T
    if pad:
        # Only the <128-element lane tail (or tiny inputs) is padded; fill makes
        # sigmoid(x)=0 and t=0 exactly, so padded lanes contribute nothing.
        # TODO(synk): fold this tiny remainder into the epilogue to avoid even this copy.
        x_flat = jnp.concatenate(
            [x_flat, jnp.full((pad,), -1e9, dtype=x_flat.dtype)])
        y_flat = jnp.concatenate(
            [y_flat, jnp.zeros((pad,), dtype=y_flat.dtype)])

    x2 = x_flat.reshape(rows, LANE)       # free reshape (no copy) when pad == 0
    y2 = y_flat.reshape(rows, LANE)

    tile_r = min(int(tile_rows), (rows // 8) * 8)   # multiple of 8, never exceeds rows
    G = -(-rows // tile_r)
    need_mask = (G * tile_r) != rows                # last grid block is ragged
    SUB = 64 if tile_r % 64 == 0 else 8             # inner chunk: fits in vregs
    n_sub = tile_r // SUB

    def kernel(x_ref, y_ref, inter_ref, tot_ref):
        g = pl.program_id(0)

        @pl.when(g == 0)
        def _():
            inter_ref[...] = jnp.zeros_like(inter_ref)
            tot_ref[...] = jnp.zeros_like(tot_ref)

        row_base = g * tile_r

        def body(i, carry):
            acc_i, acc_t = carry
            r0 = pl.multiple_of(i * SUB, SUB)
            x = x_ref[pl.ds(r0, SUB), :].astype(jnp.float32)
            y = y_ref[pl.ds(r0, SUB), :].astype(jnp.float32)
            # sigmoid via tanh: transcendental goes to the EUP slot, no f32 divide.
            p = 0.5 * jnp.tanh(0.5 * x) + 0.5
            if need_mask:
                rid = row_base + r0 + jax.lax.broadcasted_iota(
                    jnp.int32, (SUB, LANE), 0)
                valid = rid < rows
                p = jnp.where(valid, p, 0.0)   # select also squashes any OOB garbage/NaN
                y = jnp.where(valid, y, 0.0)
            # Fold the chunk onto native (8,128) vreg groups: pure VPU adds, no XLU.
            pg = (p * y).reshape(SUB // 8, 8, LANE).sum(axis=0)
            tg = (p + y).reshape(SUB // 8, 8, LANE).sum(axis=0)
            return acc_i + pg, acc_t + tg

        zeros = jnp.zeros((8, LANE), jnp.float32)
        acc_i, acc_t = jax.lax.fori_loop(0, n_sub, body, (zeros, zeros))
        inter_ref[...] += acc_i
        tot_ref[...] += acc_t

    # Double-buffered input tiles + slack; cap respects the chip's VMEM.
    tile_bytes = tile_r * LANE * (x2.dtype.itemsize + y2.dtype.itemsize)
    vmem_limit = int(min(vmem_cap,
                         max(32 * 1024 * 1024, 2 * tile_bytes + 8 * 1024 * 1024)))

    cost = pl.CostEstimate(
        flops=9 * rows * LANE,
        transcendentals=rows * LANE,
        bytes_accessed=int(x2.size * x2.dtype.itemsize
                           + y2.size * y2.dtype.itemsize),
    )

    out_sds = jax.ShapeDtypeStruct((8, LANE), jnp.float32)
    inter_p, tot_p = pl.pallas_call(
        kernel,
        out_shape=(out_sds, out_sds),
        grid_spec=pltpu.PrefetchScalarGridSpec(
            num_scalar_prefetch=0,
            grid=(G,),
            in_specs=[
                pl.BlockSpec((tile_r, LANE), lambda g: (g, 0)),
                pl.BlockSpec((tile_r, LANE), lambda g: (g, 0)),
            ],
            out_specs=(
                pl.BlockSpec((8, LANE), lambda g: (0, 0)),
                pl.BlockSpec((8, LANE), lambda g: (0, 0)),
            ),
        ),
        compiler_params=pltpu.CompilerParams(
            dimension_semantics=("arbitrary",),
            vmem_limit_bytes=vmem_limit,
        ),
        cost_estimate=cost,
    )(x2, y2)

    # O(1) epilogue: fold the (8,128) partials and form the IoU ratio.
    intersection = jnp.sum(inter_p)
    total = jnp.sum(tot_p)
    union = total - intersection
    iou = (intersection + smooth) / (union + smooth)
    return 1.0 - iou


def iou_loss_ref(inputs, targets, smooth=1.0):
    """Pure-JAX reference mirroring the PyTorch IoULoss.forward exactly."""
    x = inputs.astype(jnp.float32).reshape(-1)
    t = targets.astype(jnp.float32).reshape(-1)
    p = 1.0 / (1.0 + jnp.exp(-x))
    intersection = jnp.sum(p * t)
    total = jnp.sum(p + t)
    union = total - intersection
    return 1.0 - (intersection + smooth) / (union + smooth)


if __name__ == "__main__":
    key = jax.random.PRNGKey(0)
    kx, ky = jax.random.split(key)
    B, C, H, W = 2, 4, 16, 16
    inputs = jax.random.normal(kx, (B, C, H, W), dtype=jnp.float32)        # logits
    targets = (jax.random.uniform(ky, (B, C, H, W)) > 0.5).astype(jnp.float32)

    loss = iou_loss(inputs, targets)
    loss = jax.block_until_ready(loss)

    ref = iou_loss_ref(inputs, targets)
    assert jnp.allclose(loss, ref, atol=1e-5, rtol=1e-4), (loss, ref)
    print("KERNEL_OK")
</pallas_src>

<mosaic_0001>
module attributes {stable_mosaic.version = 11 : i64} {
  func.func @kernel(%arg0: i32, %arg1: memref<16x128xf32, #tpu.memory_space<vmem>>, %arg2: memref<16x128xf32, #tpu.memory_space<vmem>>, %arg3: memref<8x128xf32, #tpu.memory_space<vmem>>, %arg4: memref<8x128xf32, #tpu.memory_space<vmem>>) attributes {dimension_semantics = [#tpu.dimension_semantics<arbitrary>], iteration_bounds = array<i64: 1>, scalar_prefetch = 0 : i64, scratch_operands = 0 : i64, tpu.core_type = #tpu.core_type<tc>, window_params = [{transform_indices = @transform_0, window_bounds = array<i64: 16, 128>}, {transform_indices = @transform_1, window_bounds = array<i64: 16, 128>}, {pipeline_mode = #tpu.pipeline_mode<synchronous>, transform_indices = @transform_2, window_bounds = array<i64: 8, 128>}, {pipeline_mode = #tpu.pipeline_mode<synchronous>, transform_indices = @transform_3, window_bounds = array<i64: 8, 128>}]} {
    %c0_i32 = arith.constant 0 : i32
    %0 = arith.cmpi eq, %arg0, %c0_i32 : i32
    %1 = arith.extui %0 : i1 to i32
    %c0_i32_0 = arith.constant 0 : i32
    %2 = arith.cmpi ne, %1, %c0_i32_0 : i32
    scf.if %2 {
      %cst_10 = arith.constant 0.000000e+00 : f32
      %12 = vector.broadcast %cst_10 : f32 to vector<8x128xf32>
      %c0_11 = arith.constant 0 : index
      %c0_12 = arith.constant 0 : index
      %13 = vector.load %arg3[%c0_11, %c0_12] : memref<8x128xf32, #tpu.memory_space<vmem>>, vector<8x128xf32>
      tpu.vector_store %arg3[%c0_11, %c0_12], %12 {strides = array<i32>} : memref<8x128xf32, #tpu.memory_space<vmem>>, vector<8x128xf32>,
      %cst_13 = arith.constant 0.000000e+00 : f32
      %14 = vector.broadcast %cst_13 : f32 to vector<8x128xf32>
      %c0_14 = arith.constant 0 : index
      %c0_15 = arith.constant 0 : index
      %15 = vector.load %arg4[%c0_14, %c0_15] : memref<8x128xf32, #tpu.memory_space<vmem>>, vector<8x128xf32>
      tpu.vector_store %arg4[%c0_14, %c0_15], %14 {strides = array<i32>} : memref<8x128xf32, #tpu.memory_space<vmem>>, vector<8x128xf32>,
    } else {
    }
    %cst = arith.constant 0.000000e+00 : f32
    %3 = vector.broadcast %cst : f32 to vector<8x128xf32>
    %c0_i32_1 = arith.constant 0 : i32
    %c2_i32 = arith.constant 2 : i32
    %4 = arith.addi %c0_i32_1, %c2_i32 : i32
    %c1_i32 = arith.constant 1 : i32
    %5:2 = scf.for %arg5 = %c0_i32_1 to %4 step %c1_i32 iter_args(%arg6 = %3, %arg7 = %3) -> (vector<8x128xf32>, vector<8x128xf32>)  : i32 {
      %c8_i32 = arith.constant 8 : i32
      %12 = arith.muli %arg5, %c8_i32 : i32
      %13 = tpu.assume_multiple %12, 8 : i32
      %14 = arith.index_cast %13 : i32 to index
      %c0_10 = arith.constant 0 : index
      %15 = vector.load %arg1[%14, %c0_10] : memref<16x128xf32, #tpu.memory_space<vmem>>, vector<8x128xf32>
      %16 = arith.index_cast %13 : i32 to index
      %c0_11 = arith.constant 0 : index
      %17 = vector.load %arg2[%16, %c0_11] : memref<16x128xf32, #tpu.memory_space<vmem>>, vector<8x128xf32>
      %cst_12 = arith.constant 5.000000e-01 : f32
      %18 = vector.broadcast %cst_12 : f32 to vector<8x128xf32>
      %19 = arith.mulf %18, %15 : vector<8x128xf32>
      %20 = math.tanh %19 : vector<8x128xf32>
      %cst_13 = arith.constant 5.000000e-01 : f32
      %21 = vector.broadcast %cst_13 : f32 to vector<8x128xf32>
      %22 = arith.mulf %21, %20 : vector<8x128xf32>
      %cst_14 = arith.constant 5.000000e-01 : f32
      %23 = vector.broadcast %cst_14 : f32 to vector<8x128xf32>
      %24 = arith.addf %22, %23 : vector<8x128xf32>
      %25 = arith.mulf %24, %17 : vector<8x128xf32>
      %26 = vector.shape_cast %25 : vector<8x128xf32> to vector<1x8x128xf32>
      %cst_15 = arith.constant dense<0.000000e+00> : vector<8x128xf32>
      %27 = vector.multi_reduction <add>, %26, %cst_15 [0] : vector<1x8x128xf32> to vector<8x128xf32>
      %28 = arith.addf %24, %17 : vector<8x128xf32>
      %29 = vector.shape_cast %28 : vector<8x128xf32> to vector<1x8x128xf32>
      %cst_16 = arith.constant dense<0.000000e+00> : vector<8x128xf32>
      %30 = vector.multi_reduction <add>, %29, %cst_16 [0] : vector<1x8x128xf32> to vector<8x128xf32>
      %31 = arith.addf %arg6, %27 : vector<8x128xf32>
      %32 = arith.addf %arg7, %30 : vector<8x128xf32>
      scf.yield %31, %32 : vector<8x128xf32>, vector<8x128xf32>
    }
    %c2_i32_2 = arith.constant 2 : i32
    %c0 = arith.constant 0 : index
    %c0_3 = arith.constant 0 : index
    %6 = vector.load %arg3[%c0, %c0_3] : memref<8x128xf32, #tpu.memory_space<vmem>>, vector<8x128xf32>
    %7 = arith.addf %6, %5#0 : vector<8x128xf32>
    %c0_4 = arith.constant 0 : index
    %c0_5 = arith.constant 0 : index
    %8 = vector.load %arg3[%c0_4, %c0_5] : memref<8x128xf32, #tpu.memory_space<vmem>>, vector<8x128xf32>
    tpu.vector_store %arg3[%c0_4, %c0_5], %7 {strides = array<i32>} : memref<8x128xf32, #tpu.memory_space<vmem>>, vector<8x128xf32>,
    %c0_6 = arith.constant 0 : index
    %c0_7 = arith.constant 0 : index
    %9 = vector.load %arg4[%c0_6, %c0_7] : memref<8x128xf32, #tpu.memory_space<vmem>>, vector<8x128xf32>
    %10 = arith.addf %9, %5#1 : vector<8x128xf32>
    %c0_8 = arith.constant 0 : index
    %c0_9 = arith.constant 0 : index
    %11 = vector.load %arg4[%c0_8, %c0_9] : memref<8x128xf32, #tpu.memory_space<vmem>>, vector<8x128xf32>
    tpu.vector_store %arg4[%c0_8, %c0_9], %10 {strides = array<i32>} : memref<8x128xf32, #tpu.memory_space<vmem>>, vector<8x128xf32>,
    return
  }
  func.func @transform_0(%arg0: i32) -> (i32, i32) {
    %c0_i32 = arith.constant 0 : i32
    %c0_i32_0 = arith.constant 0 : i32
    return %arg0, %c0_i32 : i32, i32
  }
  func.func @transform_1(%arg0: i32) -> (i32, i32) {
    %c0_i32 = arith.constant 0 : i32
    %c0_i32_0 = arith.constant 0 : i32
    return %arg0, %c0_i32 : i32, i32
  }
  func.func @transform_2(%arg0: i32) -> (i32, i32) {
    %c0_i32 = arith.constant 0 : i32
    %c0_i32_0 = arith.constant 0 : i32
    %c0_i32_1 = arith.constant 0 : i32
    return %c0_i32, %c0_i32_0 : i32, i32
  }
  func.func @transform_3(%arg0: i32) -> (i32, i32) {
    %c0_i32 = arith.constant 0 : i32
    %c0_i32_0 = arith.constant 0 : i32
    %c0_i32_1 = arith.constant 0 : i32
    return %c0_i32, %c0_i32_0 : i32, i32
  }
}

</mosaic_0001>

<llo_original>
// kernel: tpu_custom_call.1
$region0: #{tpu_custom_call.1}
  #allocation0 [shape = 'u32[]', space=smem, size = 0x4, offset = 0x4, fixed_abs, tag = 'smem constant byte address 0x4 - core index']
  #allocation1 [shape = 'u32[72,128]{1,0:T(1,128)}', space=vmem, size = 0x9000, scoped, tag = 'internal scratch']
  %s0 = inlined_call_operand.hbm [shape: f32[16,128], index: 0, kind: input, shape index: {}]
  %s1 = inlined_call_operand.hbm [shape: f32[16,128], index: 1, kind: input, shape index: {}]
  %s2 = inlined_call_operand.hbm [shape: f32[8,128], index: 2, kind: output, shape index: {0}]
  %s3 = inlined_call_operand.hbm [shape: f32[8,128], index: 3, kind: output, shape index: {1}]
  %4 = xla_tuple %s2, %s3
  %s5 = sld [smem:[#allocation0]]
  $region45: #{tpu_custom_call.1} parent=0
    _
  %s7 = ssub.s32 1, %s5
  %s8 = scalar_select 0, %s7, %s5
  $region1: #{tpu_custom_call.1} parent=0
    #allocation2 [shape = 'u8[8192]{0}', space=vmem, size = 0x2000, scoped, tag = 'input window, operand 0, single buffered']
    #allocation3 [shape = 's32[1]{0}', space=sflag, size = 0x4, scoped, tag = 'scoped memory for tpu_custom_call.1']
    #allocation4 [shape = 's32[1]{0}', space=sflag, size = 0x4, scoped, tag = 'scoped memory for tpu_custom_call.1']
    #allocation5 [shape = 'u8[8192]{0}', space=vmem, size = 0x2000, scoped, tag = 'input window, operand 1, single buffered']
    #allocation6 [shape = 's32[1]{0}', space=sflag, size = 0x4, scoped, tag = 'scoped memory for tpu_custom_call.1']
    #allocation7 [shape = 'u8[4096]{0}', space=vmem, size = 0x1000, scoped, tag = 'output window, operand 0, single buffered']
    #allocation8 [shape = 'u8[4096]{0}', space=vmem, size = 0x1000, scoped, tag = 'output window, operand 1, single buffered']
    #allocation9 [shape = 's32[1]{0}', space=sflag, size = 0x4, scoped, tag = 'scoped memory for tpu_custom_call.1']
    %9 = vsyncpa [#allocation3], 0
    %10 = vsyncpa [#allocation6], 0
    %11 = vsyncpa [#allocation4], 0
    %12 = vsyncpa [#allocation9], 0
    // Predicated region
    $region2: #{tpu_custom_call.1} parent=1 // pred_check
      _
    $region3: #{tpu_custom_call.1} parent=1 // pred_check_branch
      %14 = sbr.rel (0) target = $region5
    $region4: #{tpu_custom_call.1} parent=1 // pred_region
      %16 = vsyncadd [#allocation3], 0
      %s17 = sshll.u32 %s0, 4
      %s18 = int_to_ptr.hbm [resolvable:$true] %s17
      %s19 = sshll.u32 [#allocation2], 4
      %s20 = int_to_ptr.vmem [resolvable:$true] %s19
      %25 = dma.hbm_to_vmem [thread:$0]  %s18, 256, %s20, [#allocation3], 128, 128, 8
    $region5: #{tpu_custom_call.1} parent=1 // pred_fallthru
      _
    // Predicated region
    $region6: #{tpu_custom_call.1} parent=1 // pred_check
      _
    $region7: #{tpu_custom_call.1} parent=1 // pred_check_branch
      %27 = sbr.rel (0) target = $region9
    $region8: #{tpu_custom_call.1} parent=1 // pred_region
      %29 = vsyncadd [#allocation6], 0
      %s30 = sshll.u32 %s1, 4
      %s31 = int_to_ptr.hbm [resolvable:$true] %s30
      %s32 = sshll.u32 [#allocation5], 4
      %s33 = int_to_ptr.vmem [resolvable:$true] %s32
      %38 = dma.hbm_to_vmem [thread:$0]  %s31, 256, %s33, [#allocation6], 128, 128, 8
    $region9: #{tpu_custom_call.1} parent=1 // pred_fallthru
      _
    // Predicated region
    $region10: #{tpu_custom_call.1} parent=1 // pred_check
      _
    $region11: #{tpu_custom_call.1} parent=1 // pred_check_branch
      %40 = sbr.rel (0) target = $region13
    $region12: #{tpu_custom_call.1} parent=1 // pred_region
      %42 = dma.done [#allocation3], 256
    $region13: #{tpu_custom_call.1} parent=1 // pred_fallthru
      _
    // Predicated region
    $region14: #{tpu_custom_call.1} parent=1 // pred_check
      _
    $region15: #{tpu_custom_call.1} parent=1 // pred_check_branch
      %44 = sbr.rel (0) target = $region17
    $region16: #{tpu_custom_call.1} parent=1 // pred_region
      %46 = dma.done [#allocation6], 256
    $region17: #{tpu_custom_call.1} parent=1 // pred_fallthru
      _
    %p47 = scmp.eq.s32.totalorder 0, 0
    // Predicated region
    $region18: #{tpu_custom_call.1} parent=1 // pred_check
      %p48 = pneg %p47
    $region19: #{tpu_custom_call.1} parent=1 // pred_check_branch
      %50 = sbr.rel (%p48) target = $region21
    $region20: #{tpu_custom_call.1} parent=1 // pred_region
      %51 = vst [vmem:[#allocation7] sm:$0xff] 0.0
      %52 = vst [vmem:[#allocation8] sm:$0xff] 0.0
    $region21: #{tpu_custom_call.1} parent=1 // pred_fallthru
      _
    loop: start=0, step=1, limit=2
    $region22: #{tpu_custom_call.1} parent=1 // loop_pre_header
      _
    $region23: #{tpu_custom_call.1} parent=1 // loop_header
      %s54 = sphi 0, %s58
      %p55 = scmp.ge.s32.totalorder %s54, 2
      %v59 = vphi 0.0, %v74
      %v60 = vphi 0.0, %v75
    $region24: #{tpu_custom_call.1} parent=1 // loop_header_branch
      %57 = sbr.rel (%p55) target = $region28
    $region25: #{tpu_custom_call.1} parent=1 // loop_body
      %s61 = smul.u32 %s54, 8
      %s62 = scalar_lea.vmem [#allocation2], %s61
      %v63 = vld [vmem:[%s62] sm:$0xff]
      %s64 = scalar_lea.vmem [#allocation5], %s61
      %v65 = vld [vmem:[%s64] sm:$0xff]
      %v66 = vmul.f32 %v63, 0.5
      %v67 = vtanh.pop %v66
      %v68 = vmul.f32 %v67, 0.5
      %v69 = vadd.f32 %v68, 0.5
      %v70 = vmul.f32 %v69, %v65
      %v71 = vadd.f32 %v70, 0.0
      %v72 = vadd.f32 %v69, %v65
      %v73 = vadd.f32 %v72, 0.0
      %v74 = vadd.f32 %v59, %v71
      %v75 = vadd.f32 %v60, %v73
    $region26: #{tpu_custom_call.1} parent=1 // loop_footer
      %s58 = sadd.s32 1, %s54
    $region27: #{tpu_custom_call.1} parent=1 // loop_footer_branch
      %53 = sbr.rel target = $region23
    $region28: #{tpu_custom_call.1} parent=1 // loop_exit
      _
    %v76 = vld [vmem:[#allocation7] sm:$0xff]
    %v77 = vadd.f32 %v76, %v59
    %78 = vst [vmem:[#allocation7] sm:$0xff] %v77
    %v79 = vld [vmem:[#allocation8] sm:$0xff]
    %v80 = vadd.f32 %v79, %v60
    %81 = vst [vmem:[#allocation8] sm:$0xff] %v80
    // Predicated region
    $region29: #{tpu_custom_call.1} parent=1 // pred_check
      _
    $region30: #{tpu_custom_call.1} parent=1 // pred_check_branch
      %83 = sbr.rel (0) target = $region32
    $region31: #{tpu_custom_call.1} parent=1 // pred_region
      %85 = vsyncadd [#allocation4], 0
      %s87 = sshll.u32 [#allocation7], 4
      %s88 = int_to_ptr.vmem [resolvable:$true] %s87
      %s89 = sshll.u32 %s2, 4
      %s90 = int_to_ptr.hbm [resolvable:$true] %s89
      %92 = dma.vmem_to_hbm [thread:$0]  %s88, 128, %s90, [#allocation4]
    $region32: #{tpu_custom_call.1} parent=1 // pred_fallthru
      _
    // Predicated region
    $region33: #{tpu_custom_call.1} parent=1 // pred_check
      _
    $region34: #{tpu_custom_call.1} parent=1 // pred_check_branch
      %94 = sbr.rel (0) target = $region36
    $region35: #{tpu_custom_call.1} parent=1 // pred_region
      %96 = vsyncadd [#allocation9], 0
      %s98 = sshll.u32 [#allocation8], 4
      %s99 = int_to_ptr.vmem [resolvable:$true] %s98
      %s100 = sshll.u32 %s3, 4
      %s101 = int_to_ptr.hbm [resolvable:$true] %s100
      %103 = dma.vmem_to_hbm [thread:$0]  %s99, 128, %s101, [#allocation9]
    $region36: #{tpu_custom_call.1} parent=1 // pred_fallthru
      _
    // Predicated region
    $region37: #{tpu_custom_call.1} parent=1 // pred_check
      _
    $region38: #{tpu_custom_call.1} parent=1 // pred_check_branch
      %105 = sbr.rel (0) target = $region40
    $region39: #{tpu_custom_call.1} parent=1 // pred_region
      %107 = dma.done [#allocation4], 128
    $region40: #{tpu_custom_call.1} parent=1 // pred_fallthru
      _
    // Predicated region
    $region41: #{tpu_custom_call.1} parent=1 // pred_check
      _
    $region42: #{tpu_custom_call.1} parent=1 // pred_check_branch
      %109 = sbr.rel (0) target = $region44
    $region43: #{tpu_custom_call.1} parent=1 // pred_region
      %111 = dma.done [#allocation9], 128
    $region44: #{tpu_custom_call.1} parent=1 // pred_fallthru
      _
    %112 = vsyncpa [#allocation3], 1
    %113 = vsyncpa [#allocation6], 1
    %114 = vsyncpa [#allocation4], 1
    %115 = vsyncpa [#allocation9], 1

</llo_original>
